<compile_context>
chip_gen: v5e
topology: v5e:2x2
jax: 0.10.0
libtpu: 0.0.40
codegen_flags: <defaults>
</compile_context>

<pallas_src>
import jax
import jax.numpy as jnp
from jax.experimental import pallas as pl
from jax.experimental.pallas import tpu as pltpu

_LANE = 128
_SUBLANE = 8
# Safe on every generation (v7x scoped default is 32 MiB / 64 MiB physical).
# On v5e/v6e with large N raise toward 64-100 MiB and sweep bigger col tiles.
_VMEM_LIMIT = 32 * 1024 * 1024
# Keep h_src fully VMEM-resident (single (N, Hp) block) when its double buffer
# fits in this budget; otherwise stream it per column tile.
_H_RESIDENT_BYTES = 8 * 1024 * 1024


def _round_up(x, m):
    return ((x + m - 1) // m) * m


def _pick_row_tile(n, target):
    """Largest multiple of 8 dividing n that is <= target.  Capped at n//2 so
    the parallel row axis has >= 2 tiles (keeps both v7x TensorCores busy)."""
    if n >= 2 * _SUBLANE and n % _SUBLANE == 0:
        target = min(target, n // 2)
    if n <= target or n % _SUBLANE != 0:
        return n
    t = max((target // _SUBLANE) * _SUBLANE, _SUBLANE)
    while t >= _SUBLANE:
        if n % t == 0:
            return t
        t -= _SUBLANE
    return n


def _pick_col_tile(n, target):
    """Largest multiple of 128 that divides n and is <= target (else full n)."""
    if n <= target or n % _LANE != 0:
        return n
    t = max((target // _LANE) * _LANE, _LANE)
    while t >= _LANE:
        if n % t == 0:
            return t
        t -= _LANE
    return n


def _plan_col_tiles(adj_bool, tr, tc):
    """Per row tile: count + ascending (tail-padded with the last valid entry)
    list of column tiles containing at least one edge.  Runs eagerly: the graph
    structure must be concrete so the inner grid bound is static."""
    n = adj_bool.shape[0]
    nr, nc = n // tr, n // tc
    act = jnp.any(adj_bool.reshape(nr, tr, nc, tc), axis=(1, 3))     # [nr, nc]
    ncols = jnp.sum(act, axis=1).astype(jnp.int32)                    # >=1 (self loops)
    key = jnp.where(act, jnp.arange(nc, dtype=jnp.int32)[None, :], nc)
    order = jnp.argsort(key, axis=1).astype(jnp.int32)                # active ids first
    last = jnp.take_along_axis(order, (ncols - 1)[:, None], axis=1)
    pos = jnp.arange(nc, dtype=jnp.int32)[None, :]
    col_ids = jnp.where(pos < ncols[:, None], order, last)            # repeat tail
    max_active = int(jnp.max(ncols))                                  # static grid bound
    return ncols, col_ids[:, :max_active], max_active


# ----------------------------------------------------------------------------
# Kernel 1: feature projection (scores + denominator "ones" column fused into
# the padded output columns -> one lane-dense bf16 output, one matmul).
# ----------------------------------------------------------------------------
def _project_kernel(h_in_ref, wt_ref, ones_ref, h_out_ref):
    h = jnp.dot(h_in_ref[...].astype(jnp.bfloat16), wt_ref[...],
                preferred_element_type=jnp.float32)
    # ones_ref is one-hot at column H: makes h[:, H] == 1.0 exactly (the
    # softmax-denominator column that rides the MXU in the attention kernel).
    h_out_ref[...] = (h + ones_ref[...]).astype(jnp.bfloat16)


def _gat_project(h_in, wt_aug, ones_col, *, tr):
    N, Din = h_in.shape
    Hp = wt_aug.shape[1]
    cost = pl.CostEstimate(
        flops=2 * N * Din * Hp,
        transcendentals=0,
        bytes_accessed=N * Din * h_in.dtype.itemsize + Din * Hp * 2 + N * Hp * 2)
    return pl.pallas_call(
        _project_kernel,
        out_shape=jax.ShapeDtypeStruct((N, Hp), jnp.bfloat16),
        grid_spec=pltpu.PrefetchScalarGridSpec(
            num_scalar_prefetch=0,
            grid=(N // tr,),
            in_specs=[pl.BlockSpec((tr, Din), lambda r: (r, 0)),
                      pl.BlockSpec((Din, Hp), lambda r: (0, 0)),
                      pl.BlockSpec((1, Hp), lambda r: (0, 0))],
            out_specs=pl.BlockSpec((tr, Hp), lambda r: (r, 0))),
        compiler_params=pltpu.CompilerParams(
            dimension_semantics=("parallel",),
            vmem_limit_bytes=_VMEM_LIMIT),
        cost_estimate=cost,
    )(h_in, wt_aug, ones_col)


# ----------------------------------------------------------------------------
# Kernel 2: block-sparse masked-softmax aggregation with online softmax.
#   grid = (row tiles [parallel], active col tiles [arbitrary/reduction])
# ----------------------------------------------------------------------------
def _make_attn_kernel(h_col, tc, h_resident):
    align = tc & -tc  # largest power-of-two divisor of tc (alignment hint)

    def kernel(ncols_ref, col_ids_ref, s_dst_ref, s_src_ref, mask_ref,
               h_src_ref, bias_ref, o_ref, m_sc, acc_sc):
        r = pl.program_id(0)
        c = pl.program_id(1)

        @pl.when(c == 0)
        def _():
            m_sc[...] = jnp.full_like(m_sc, -1e30)
            acc_sc[...] = jnp.zeros_like(acc_sc)

        # Skip column tiles with no edges for this row tile (block-sparse).
        @pl.when(c < ncols_ref[r])
        def _():
            # e[i, j] = LeakyReLU(s_dst[i] + s_src[j]) + mask[i, j]
            # mask is 0 on edges / self-loops, -1e30 otherwise (additive).
            e = s_dst_ref[...] + s_src_ref[...]          # [tr,1]+[1,tc] -> [tr,tc]
            e = jnp.where(e > 0, e, 0.2 * e)             # LeakyReLU(0.2)
            e = e + mask_ref[...].astype(jnp.float32)

            m_prev = m_sc[...]
            m_new = jnp.maximum(m_prev, jnp.max(e, axis=-1, keepdims=True))
            alpha = jnp.exp(m_prev - m_new)
            p = jnp.exp(e - m_new)
            # NOTE: the mask fill must remain a large *finite* negative
            # (-1e30): exp(-1e30 - m) flushes to exactly 0 in f32, and any
            # garbage picked up by a row before it sees its first real edge is
            # annihilated by alpha == 0 once one arrives (self-loops guarantee
            # every row sees a real edge).  Do not change the fill to -inf.
            if h_resident:
                col0 = pl.multiple_of(col_ids_ref[r, c] * tc, align)
                h_blk = h_src_ref[pl.ds(col0, tc), :]
            else:
                h_blk = h_src_ref[...]
            # Column h_col of h_blk is a constant 1.0, so acc[:, h_col]
            # accumulates the softmax denominator on the MXU (no XLU row-sum).
            acc_sc[...] = alpha * acc_sc[...] + jnp.dot(
                p.astype(jnp.bfloat16), h_blk,
                preferred_element_type=jnp.float32)
            m_sc[...] = m_new

        @pl.when(c == pl.num_programs(1) - 1)
        def _():
            l = acc_sc[:, h_col:h_col + 1]               # denominator (>= 1)
            out = acc_sc[...] * pl.reciprocal(l, approx=True) + bias_ref[...]
            o_ref[...] = jnp.maximum(out, 0.0).astype(o_ref.dtype)  # bias + ReLU

    return kernel


def _gat_attention(h_src, s_dst, s_src_row, mask, ncols, col_ids, bias, *,
                   h_col, tr, tc, out_dtype):
    N, Hp = h_src.shape
    nr = N // tr
    max_active = col_ids.shape[1]
    h_resident = 2 * N * Hp * h_src.dtype.itemsize <= _H_RESIDENT_BYTES

    if h_resident:
        h_spec = pl.BlockSpec((N, Hp), lambda r, c, ncs, ids: (0, 0))
    else:
        h_spec = pl.BlockSpec((tc, Hp), lambda r, c, ncs, ids: (ids[r, c], 0))

    active_total = int(jnp.sum(ncols))
    cost = pl.CostEstimate(
        flops=active_total * (2 * tr * tc * Hp + 10 * tr * tc),
        transcendentals=active_total * (tr * tc + tr),
        bytes_accessed=(active_total * (tr * tc * 2 + tc * 4)
                        + N * 4 + N * Hp * 2
                        + N * Hp * jnp.dtype(out_dtype).itemsize))

    return pl.pallas_call(
        _make_attn_kernel(h_col, tc, h_resident),
        out_shape=jax.ShapeDtypeStruct((N, Hp), out_dtype),
        grid_spec=pltpu.PrefetchScalarGridSpec(
            num_scalar_prefetch=2,
            grid=(nr, max_active),
            in_specs=[pl.BlockSpec((tr, 1), lambda r, c, ncs, ids: (r, 0)),
                      pl.BlockSpec((1, tc), lambda r, c, ncs, ids: (0, ids[r, c])),
                      pl.BlockSpec((tr, tc), lambda r, c, ncs, ids: (r, ids[r, c])),
                      h_spec,
                      pl.BlockSpec((1, Hp), lambda r, c, ncs, ids: (0, 0))],
            out_specs=pl.BlockSpec((tr, Hp), lambda r, c, ncs, ids: (r, 0)),
            scratch_shapes=[pltpu.VMEM((tr, 1), jnp.float32),
                            pltpu.VMEM((tr, Hp), jnp.float32)]),
        compiler_params=pltpu.CompilerParams(
            dimension_semantics=("parallel", "arbitrary"),
            vmem_limit_bytes=_VMEM_LIMIT),
        cost_estimate=cost,
    )(ncols, col_ids, s_dst, s_src_row, mask, h_src, bias)


# ----------------------------------------------------------------------------
# Full forward pass.
# ----------------------------------------------------------------------------
def gat_forward(x, edge_index, params, size_subgraph, *,
                row_tile=512, col_tile=512):
    # NOTE: adjacency/tile planning is eager (edge_index must be concrete so
    # the inner grid bound is static); the heavy math runs in Pallas kernels.
    N, F = x.shape
    H = params["w1"].shape[0]
    S = size_subgraph
    G = N // S
    # Padded width: [ features(0..H-1) | ones(H) | s_dst(H+1) | s_src(H+2) | 0 ]
    Hp = _round_up(H + 3, _LANE)

    tr = _pick_row_tile(N, row_tile)
    tc = _pick_col_tile(N, col_tile)

    # Boolean adjacency (adj[i, j] = 1 iff edge j -> i) with self loops ->
    # additive bf16 mask + block-sparse column-tile plan shared by both layers.
    src, dst = edge_index[0], edge_index[1]
    adj_bool = jnp.zeros((N, N), jnp.bool_).at[dst, src].set(True)
    adj_bool = adj_bool | jnp.eye(N, dtype=jnp.bool_)
    mask = jnp.where(adj_bool, 0.0, -1e30).astype(jnp.bfloat16)
    ncols, col_ids, _ = _plan_col_tiles(adj_bool, tr, tc)

    def layer_params(w, a_src, a_dst, b, din_p):
        h, din = w.shape
        wt = jnp.zeros((din_p, Hp), jnp.float32)
        wt = wt.at[:din, :h].set(w.T)
        wt = wt.at[:din, h + 1].set((w.T @ a_dst)[:, 0])   # fused dst-score col
        wt = wt.at[:din, h + 2].set((w.T @ a_src)[:, 0])   # fused src-score col
        ones_col = jnp.zeros((1, Hp), jnp.float32).at[0, h].set(1.0)
        bias = jnp.zeros((1, Hp), jnp.float32).at[:, :h].set(b)
        return wt.astype(jnp.bfloat16), ones_col, bias

    wt1, ones1, b1 = layer_params(params["w1"], params["as1"], params["ad1"],
                                  params["b1"], F)
    wt2, ones2, b2 = layer_params(params["w2"], params["as2"], params["ad2"],
                                  params["b2"], Hp)

    def layer(h_in, wt, ones_col, bias, out_dtype):
        h_aug = _gat_project(h_in, wt, ones_col, tr=tr)           # [N, Hp] bf16
        s_dst = h_aug[:, H + 1:H + 2].astype(jnp.float32)         # [N, 1]
        s_src_row = jnp.transpose(
            h_aug[:, H + 2:H + 3]).astype(jnp.float32)            # [1, N] lane-major
        return _gat_attention(h_aug, s_dst, s_src_row, mask, ncols, col_ids,
                              bias, h_col=H, tr=tr, tc=tc, out_dtype=out_dtype)

    # Layer 1 (project -> attention + bias + ReLU), bf16 output.
    z1 = layer(x.astype(jnp.bfloat16), wt1, ones1, b1, jnp.bfloat16)
    # Layer 2, f32 output for the head.  (wt2 rows >= H are zero, so the
    # polluted padded columns of z1 are ignored.)
    z2 = layer(z1, wt2, ones2, b2, jnp.float32)

    # Final Linear over reshape(x, (G, S*H)): tiny 1-wide matmul in the wrapper.
    feats = z2[:, :H].reshape(G, S * H)
    return feats @ params["wout"].T + params["bout"]


def init_params(key, num_node_features, num_hidden, size_subgraph):
    F, H, S = num_node_features, num_hidden, size_subgraph
    ks = jax.random.split(key, 10)
    return {
        "w1":   0.1 * jax.random.normal(ks[0], (H, F), jnp.float32),
        "as1":  0.1 * jax.random.normal(ks[1], (H, 1), jnp.float32),
        "ad1":  0.1 * jax.random.normal(ks[2], (H, 1), jnp.float32),
        "b1":   0.1 * jax.random.normal(ks[3], (1, H), jnp.float32),
        "w2":   0.1 * jax.random.normal(ks[4], (H, H), jnp.float32),
        "as2":  0.1 * jax.random.normal(ks[5], (H, 1), jnp.float32),
        "ad2":  0.1 * jax.random.normal(ks[6], (H, 1), jnp.float32),
        "b2":   0.1 * jax.random.normal(ks[7], (1, H), jnp.float32),
        "wout": 0.1 * jax.random.normal(ks[8], (1, S * H), jnp.float32),
        "bout": 0.1 * jax.random.normal(ks[9], (1, 1), jnp.float32),
    }


if __name__ == "__main__":
    # Module-consistent shapes: num_node_features=8, num_hidden=32, subgraph=8.
    # 32 subgraphs -> N = 256 nodes: 2 parallel row tiles x 1 active column
    # tile per row tile (block-diagonal graph -> the skip plan drops half the
    # adjacency tiles even at this tiny scale).
    F_IN, HIDDEN, SUBGRAPH, N_GRAPHS = 8, 32, 8, 32
    N = SUBGRAPH * N_GRAPHS

    key = jax.random.PRNGKey(0)
    kx, kp = jax.random.split(key)
    x = jax.random.normal(kx, (N, F_IN), jnp.float32)

    # Deterministic edge_index: bidirectional ring within each subgraph.
    src_list, dst_list = [], []
    for g in range(N_GRAPHS):
        base = g * SUBGRAPH
        for n in range(SUBGRAPH):
            a, b = base + n, base + (n + 1) % SUBGRAPH
            src_list += [a, b]
            dst_list += [b, a]
    edge_index = jnp.array([src_list, dst_list], dtype=jnp.int32)

    params = init_params(kp, F_IN, HIDDEN, SUBGRAPH)

    out = gat_forward(x, edge_index, params, SUBGRAPH,
                      row_tile=128, col_tile=128)
    out = jax.block_until_ready(out)
    assert out.shape == (N_GRAPHS, 1) and out.dtype == jnp.float32
    print("KERNEL_OK")
</pallas_src>

<mosaic_0001>
module attributes {stable_mosaic.version = 11 : i64} {
  func.func @_project_kernel(%arg0: i32, %arg1: memref<128x8xbf16, #tpu.memory_space<vmem>>, %arg2: memref<8x128xbf16, #tpu.memory_space<vmem>>, %arg3: memref<1x128xf32, #tpu.memory_space<vmem>>, %arg4: memref<128x128xbf16, #tpu.memory_space<vmem>>) attributes {dimension_semantics = [#tpu.dimension_semantics<parallel>], iteration_bounds = array<i64: 2>, scalar_prefetch = 0 : i64, scratch_operands = 0 : i64, tpu.core_type = #tpu.core_type<tc>, window_params = [{transform_indices = @transform_0, window_bounds = array<i64: 128, 8>}, {pipeline_mode = #tpu.pipeline_mode<synchronous>, transform_indices = @transform_1, window_bounds = array<i64: 8, 128>}, {pipeline_mode = #tpu.pipeline_mode<synchronous>, transform_indices = @transform_2, window_bounds = array<i64: 1, 128>}, {transform_indices = @transform_3, window_bounds = array<i64: 128, 128>}]} {
    %c0 = arith.constant 0 : index
    %c0_0 = arith.constant 0 : index
    %0 = vector.load %arg1[%c0, %c0_0] : memref<128x8xbf16, #tpu.memory_space<vmem>>, vector<128x8xbf16>
    %c0_1 = arith.constant 0 : index
    %c0_2 = arith.constant 0 : index
    %1 = vector.load %arg2[%c0_1, %c0_2] : memref<8x128xbf16, #tpu.memory_space<vmem>>, vector<8x128xbf16>
    %cst = arith.constant dense<0.000000e+00> : vector<128x128xf32>
    %2 = tpu.matmul %0, %1, %cst {dimension_numbers = #tpu.dot_dimension_numbers<[1], [0], [0], [1], [0, 0, 1, 1], [], []>} : vector<128x8xbf16>, vector<8x128xbf16>, vector<128x128xf32> -> vector<128x128xf32>
    %c0_3 = arith.constant 0 : index
    %c0_4 = arith.constant 0 : index
    %3 = vector.load %arg3[%c0_3, %c0_4] : memref<1x128xf32, #tpu.memory_space<vmem>>, vector<1x128xf32>
    %4 = vector.broadcast %3 : vector<1x128xf32> to vector<128x128xf32>
    %5 = arith.addf %2, %4 : vector<128x128xf32>
    %6 = arith.truncf %5 : vector<128x128xf32> to vector<128x128xbf16>
    %c0_5 = arith.constant 0 : index
    %c0_6 = arith.constant 0 : index
    %7 = vector.load %arg4[%c0_5, %c0_6] : memref<128x128xbf16, #tpu.memory_space<vmem>>, vector<128x128xbf16>
    tpu.vector_store %arg4[%c0_5, %c0_6], %6 {strides = array<i32>} : memref<128x128xbf16, #tpu.memory_space<vmem>>, vector<128x128xbf16>,
    return
  }
  func.func @transform_0(%arg0: i32) -> (i32, i32) {
    %c0_i32 = arith.constant 0 : i32
    %c0_i32_0 = arith.constant 0 : i32
    return %arg0, %c0_i32 : i32, i32
  }
  func.func @transform_1(%arg0: i32) -> (i32, i32) {
    %c0_i32 = arith.constant 0 : i32
    %c0_i32_0 = arith.constant 0 : i32
    %c0_i32_1 = arith.constant 0 : i32
    return %c0_i32, %c0_i32_0 : i32, i32
  }
  func.func @transform_2(%arg0: i32) -> (i32, i32) {
    %c0_i32 = arith.constant 0 : i32
    %c0_i32_0 = arith.constant 0 : i32
    %c0_i32_1 = arith.constant 0 : i32
    return %c0_i32, %c0_i32_0 : i32, i32
  }
  func.func @transform_3(%arg0: i32) -> (i32, i32) {
    %c0_i32 = arith.constant 0 : i32
    %c0_i32_0 = arith.constant 0 : i32
    return %arg0, %c0_i32 : i32, i32
  }
}

</mosaic_0001>

<llo_original>
// kernel: tpu_custom_call.1
$region0: #{tpu_custom_call.1}
  #allocation0 [shape = 'u32[]', space=smem, size = 0x4, offset = 0x4, fixed_abs, tag = 'smem constant byte address 0x4 - core index']
  #allocation1 [shape = 'u32[72,128]{1,0:T(1,128)}', space=vmem, size = 0x9000, scoped, tag = 'internal scratch']
  %s0 = inlined_call_operand.vmem [shape: bf16[256,8], index: 0, kind: input, shape index: {}]
  %s1 = inlined_call_operand.vmem [shape: bf16[8,128], index: 1, kind: input, shape index: {}]
  %s2 = inlined_call_operand.vmem [shape: f32[1,128], index: 2, kind: input, shape index: {}]
  %s3 = inlined_call_operand.hbm [shape: bf16[256,128], index: 3, kind: output, shape index: {}]
  %s4 = sld [smem:[#allocation0]]
  $region45: #{tpu_custom_call.1} parent=0
    _
  %s6 = ssub.s32 1, %s4
  %s7 = scalar_select 0, %s6, %s4
  $region1: #{tpu_custom_call.1} parent=0
    #allocation2 [shape = 'u8[65536]{0}', space=vmem, size = 0x10000, scoped, tag = 'output window, operand 0']
    #allocation3 [shape = 's32[2]{0}', space=sflag, size = 0x8, scoped, tag = 'scoped memory for tpu_custom_call.1']
    %8 = vsyncpa [#allocation3], 0
    %s9 = scalar_lea.sflag [#allocation3], 1
    %10 = vsyncpa %s9, 0
    loop: start=0, step=1, limit=4
    $region2: #{tpu_custom_call.1} parent=1 // loop_pre_header
      _
    $region3: #{tpu_custom_call.1} parent=1 // loop_header
      %s12 = sphi 0, %s16
      %p13 = scmp.ge.s32.totalorder %s12, 4
      %s22 = sphi 0, %s24
      %s25 = sphi 0, %s22
      %s26 = sphi 0, %s25
      %s42 = sphi 0, %s26
      %s46 = sphi 0, %s46
      %s48 = sphi 0, %s46
      %s49 = sphi 0, %s48
      %s63 = sphi 0, %s49
      %s67 = sphi 0, %s67
      %s69 = sphi 0, %s67
      %s70 = sphi 0, %s69
      %s84 = sphi 0, %s70
      %s90 = sphi 0, %s92
      %s93 = sphi 0, %s90
      %s94 = sphi 0, %s93
      %s110 = sphi 0, %s94
    $region4: #{tpu_custom_call.1} parent=1 // loop_header_branch
      %15 = sbr.rel (%p13) target = $region8
    $region5: #{tpu_custom_call.1} parent=1 // loop_body
      %s17 = ssub.s32 %s12, 1
      %s18 = ssub.s32 %s12, 2
      %s19 = sadd.s32 %s12, 1
      %s20 = ssub.s32 %s12, %s19
      %p21 = scmp.eq.s32.totalorder %s20, 0
      %s23 = sadd.s32 %s22, 1
      %s24 = scalar_select %p21, %s22, %s23
      %p27 = pneg %p21
      %p28 = scmp.eq.s32.totalorder %s12, 1
      %p29 = por %p27, %p28
      %p30 = scmp.ne.s32.totalorder %s22, %s25
      %p31 = scmp.eq.s32.totalorder %s12, 0
      %p32 = por %p30, %p31
      %p33 = scmp.ne.s32.totalorder %s22, %s25
      %p34 = scmp.eq.s32.totalorder %s17, 1
      %p35 = por %p33, %p34
      %p36 = scmp.ne.s32.totalorder %s25, %s26
      %p37 = scmp.eq.s32.totalorder %s17, 0
      %p38 = por %p36, %p37
      %p39 = scmp.ne.s32.totalorder %s25, %s26
      %p40 = scmp.eq.s32.totalorder %s18, 1
      %p41 = por %p39, %p40
      %p43 = scmp.ne.s32.totalorder %s26, %s42
      %p44 = scmp.eq.s32.totalorder %s18, 0
      %p45 = por %p43, %p44
      %s47 = sadd.s32 %s46, 1
      %p50 = scmp.eq.s32.totalorder %s12, 1
      %p51 = scmp.ne.s32.totalorder %s46, %s48
      %p52 = scmp.eq.s32.totalorder %s12, 0
      %p53 = por %p51, %p52
      %p54 = scmp.ne.s32.totalorder %s46, %s48
      %p55 = scmp.eq.s32.totalorder %s17, 1
      %p56 = por %p54, %p55
      %p57 = scmp.ne.s32.totalorder %s48, %s49
      %p58 = scmp.eq.s32.totalorder %s17, 0
      %p59 = por %p57, %p58
      %p60 = scmp.ne.s32.totalorder %s48, %s49
      %p61 = scmp.eq.s32.totalorder %s18, 1
      %p62 = por %p60, %p61
      %p64 = scmp.ne.s32.totalorder %s49, %s63
      %p65 = scmp.eq.s32.totalorder %s18, 0
      %p66 = por %p64, %p65
      %s68 = sadd.s32 %s67, 1
      %p71 = scmp.eq.s32.totalorder %s12, 1
      %p72 = scmp.ne.s32.totalorder %s67, %s69
      %p73 = scmp.eq.s32.totalorder %s12, 0
      %p74 = por %p72, %p73
      %p75 = scmp.ne.s32.totalorder %s67, %s69
      %p76 = scmp.eq.s32.totalorder %s17, 1
      %p77 = por %p75, %p76
      %p78 = scmp.ne.s32.totalorder %s69, %s70
      %p79 = scmp.eq.s32.totalorder %s17, 0
      %p80 = por %p78, %p79
      %p81 = scmp.ne.s32.totalorder %s69, %s70
      %p82 = scmp.eq.s32.totalorder %s18, 1
      %p83 = por %p81, %p82
      %p85 = scmp.ne.s32.totalorder %s70, %s84
      %p86 = scmp.eq.s32.totalorder %s18, 0
      %p87 = por %p85, %p86
      %s88 = ssub.s32 %s12, %s19
      %p89 = scmp.eq.s32.totalorder %s88, 0
      %s91 = sadd.s32 %s90, 1
      %s92 = scalar_select %p89, %s90, %s91
      %p95 = pneg %p89
      %p96 = scmp.eq.s32.totalorder %s12, 1
      %p97 = por %p95, %p96
      %p98 = scmp.ne.s32.totalorder %s90, %s93
      %p99 = scmp.eq.s32.totalorder %s12, 0
      %p100 = por %p98, %p99
      %p101 = scmp.ne.s32.totalorder %s90, %s93
      %p102 = scmp.eq.s32.totalorder %s17, 1
      %p103 = por %p101, %p102
      %p104 = scmp.ne.s32.totalorder %s93, %s94
      %p105 = scmp.eq.s32.totalorder %s17, 0
      %p106 = por %p104, %p105
      %p107 = scmp.ne.s32.totalorder %s93, %s94
      %p108 = scmp.eq.s32.totalorder %s18, 1
      %p109 = por %p107, %p108
      %p111 = scmp.ne.s32.totalorder %s94, %s110
      %p112 = scmp.eq.s32.totalorder %s18, 0
      %p113 = por %p111, %p112
      %p114 = scmp.le.s32.totalorder 1, %s12
      %p115 = scmp.lt.s32.totalorder %s12, 3
      %p116 = pnand %p114, %p115
      %p117 = pneg %p116
      // Predicated region
      $region9: #{tpu_custom_call.1} parent=5 // pred_check
        _
      $region10: #{tpu_custom_call.1} parent=5 // pred_check_branch
        %119 = sbr.rel (%p116) target = $region12
      $region11: #{tpu_custom_call.1} parent=5 // pred_region
        %s120 = ssub.s32 %s12, 1
        // Predicated region
        $region13: #{tpu_custom_call.1} parent=11 // pred_check
          %p121 = pneg %p59
        $region14: #{tpu_custom_call.1} parent=11 // pred_check_branch
          %123 = sbr.rel (%p121) target = $region16
        $region15: #{tpu_custom_call.1} parent=11 // pred_region
          _
        $region16: #{tpu_custom_call.1} parent=11 // pred_fallthru
          _
        // Predicated region
        $region17: #{tpu_custom_call.1} parent=11 // pred_check
          %p124 = pneg %p80
        $region18: #{tpu_custom_call.1} parent=11 // pred_check_branch
          %126 = sbr.rel (%p124) target = $region20
        $region19: #{tpu_custom_call.1} parent=11 // pred_region
          _
        $region20: #{tpu_custom_call.1} parent=11 // pred_fallthru
          _
      $region12: #{tpu_custom_call.1} parent=5 // pred_fallthru
        _
      %p127 = scmp.lt.s32.totalorder %s12, 2
      // Predicated region
      $region21: #{tpu_custom_call.1} parent=5 // pred_check
        %p128 = pneg %p127
      $region22: #{tpu_custom_call.1} parent=5 // pred_check_branch
        %130 = sbr.rel (%p128) target = $region24
      $region23: #{tpu_custom_call.1} parent=5 // pred_region
        // Predicated region
        $region25: #{tpu_custom_call.1} parent=23 // pred_check
          %p131 = pneg %p32
        $region26: #{tpu_custom_call.1} parent=23 // pred_check_branch
          %133 = sbr.rel (%p131) target = $region28
        $region27: #{tpu_custom_call.1} parent=23 // pred_region
          %s134 = smul.u32 16, %s12
          %p135 = scmp.lt.s32.totalorder %s134, 31
          %s136 = scalar_select %p135, %s134, 31
          %s137 = smul.addr %s136, 4
          %s138 = scalar_lea.vmem %s0, %s137
          %s139 = smul.u32 16, %s12
        $region28: #{tpu_custom_call.1} parent=23 // pred_fallthru
          _
      $region24: #{tpu_custom_call.1} parent=5 // pred_fallthru
        _
      %p140 = scmp.le.s32.totalorder 1, %s12
      %p141 = scmp.lt.s32.totalorder %s12, 3
      %p142 = pnand %p140, %p141
      %p143 = pneg %p142
      // Predicated region
      $region29: #{tpu_custom_call.1} parent=5 // pred_check
        _
      $region30: #{tpu_custom_call.1} parent=5 // pred_check_branch
        %145 = sbr.rel (%p142) target = $region32
      $region31: #{tpu_custom_call.1} parent=5 // pred_region
        %s146 = ssub.s32 %s12, 1
        %s147 = smul.u32 16, %s17
        %p148 = scmp.lt.s32.totalorder %s147, 31
        %s149 = scalar_select %p148, %s147, 31
        %s150 = smul.addr %s149, 4
        %s151 = scalar_lea.vmem %s0, %s150
        %p152 = pneg %p38
        %p153 = pneg %p35
        %p154 = pneg %p59
        %p155 = pneg %p56
        %p156 = pneg %p80
        %p157 = pneg %p77
        %p158 = pneg %p106
        %p159 = pneg %p103
        %s160 = sand.u32 %s93, 1
        %s161 = scalar_lea.sflag [#allocation3], %s160
        %s162 = sand.u32 %s93, 1
        %s163 = smul.addr %s162, 64
        %s164 = scalar_lea.vmem [#allocation2], %s163
        %s165 = smul.u32 16, %s17
        %p166 = scmp.lt.s32.totalorder %s165, 31
        %s167 = scalar_select %p166, %s165, 31
        %s168 = smul.addr %s167, 4
        %s169 = scalar_lea.vmem %s0, %s168
        %s170 = smul.u32 16, %s17
        %s171 = smul.u32 16, %s17
        %v173 = vld [vmem:[%s169] sm:$0xf]
        %v174 = vld [vmem:[%s169 + $0x4] sm:$0xf]
        %v175 = vld [vmem:[%s169 + $0x8] sm:$0xf]
        %v176 = vld [vmem:[%s169 + $0xc] sm:$0xf]
        %v177 = vld [vmem:[%s169 + $0x10] sm:$0xf]
        %v178 = vld [vmem:[%s169 + $0x14] sm:$0xf]
        %v179 = vld [vmem:[%s169 + $0x18] sm:$0xf]
        %v180 = vld [vmem:[%s169 + $0x1c] sm:$0xf]
        %v181 = vld [vmem:[%s169 + $0x20] sm:$0xf]
        %v182 = vld [vmem:[%s169 + $0x24] sm:$0xf]
        %v183 = vld [vmem:[%s169 + $0x28] sm:$0xf]
        %v184 = vld [vmem:[%s169 + $0x2c] sm:$0xf]
        %v185 = vld [vmem:[%s169 + $0x30] sm:$0xf]
        %v186 = vld [vmem:[%s169 + $0x34] sm:$0xf]
        %v187 = vld [vmem:[%s169 + $0x38] sm:$0xf]
        %v188 = vld [vmem:[%s169 + $0x3c] sm:$0xf]
        %v189 = vld [vmem:[%s1] sm:$0xf]
        %v190 = vld [vmem:[%s2] sm:$0x1]
        %v192 = vperm.slane %v190, 0
        %v210 = vunpack.c.l.b16 %v173
        %v211 = vunpack.c.l.b16 %v174
        %v212 = vunpack.c.l.b16 %v175
        %v213 = vunpack.c.l.b16 %v176
        %v214 = vunpack.c.l.b16 %v177
        %v215 = vunpack.c.l.b16 %v178
        %v216 = vunpack.c.l.b16 %v179
        %v217 = vunpack.c.l.b16 %v180
        %v218 = vunpack.c.l.b16 %v181
        %v219 = vunpack.c.l.b16 %v182
        %v220 = vunpack.c.l.b16 %v183
        %v221 = vunpack.c.l.b16 %v184
        %v222 = vunpack.c.l.b16 %v185
        %v223 = vunpack.c.l.b16 %v186
        %v224 = vunpack.c.l.b16 %v187
        %v225 = vunpack.c.l.b16 %v188
        %v226 = vpack.c.b16 %v211, %v210
        %v227 = vpack.c.b16 %v213, %v212
        %v228 = vpack.c.b16 %v215, %v214
        %v229 = vpack.c.b16 %v217, %v216
        %v230 = vpack.c.b16 %v219, %v218
        %v231 = vpack.c.b16 %v221, %v220
        %v232 = vpack.c.b16 %v223, %v222
        %v233 = vpack.c.b16 %v225, %v224
        %vm234 = vcmask 64512
        %v236 = vsel %vm234, %v226, 0
        %v239 = vsel %vm234, %v227, 0
        %v242 = vsel %vm234, %v228, 0
        %v245 = vsel %vm234, %v229, 0
        %v248 = vsel %vm234, %v230, 0
        %v251 = vsel %vm234, %v231, 0
        %v254 = vsel %vm234, %v232, 0
        %v257 = vsel %vm234, %v233, 0
        %vm259 = vcmask 1043456
        %v261 = vsel %vm259, %v189, 0
        %263 = vmatpush.bf16.msra.mxu0 0
        %264 = vmatpush.bf16.msra.mxu0 0
        %265 = vmatpush.bf16.msra.mxu0 0
        %266 = vmatpush.bf16.msra.mxu0 0
        %267 = vmatpush.bf16.msra.mxu0 0
        %268 = vmatpush.bf16.msra.mxu0 0
        %269 = vmatpush.bf16.msra.mxu0 0
        %270 = vmatpush.bf16.msra.mxu0 %v261
        %271 = vmatmul.bf16.gmra.mxu0 %v236
        %v272 = vpop.f32.mrf.mxu0
        %v273 = vadd.f32 %v192, %v272
        %v274 = vpop.f32.mrf.mxu0
        %v275 = vadd.f32 %v192, %v274
        %276 = vmatmul.bf16.gmra.mxu0 %v239
        %v277 = vpop.f32.mrf.mxu0
        %v278 = vadd.f32 %v192, %v277
        %v279 = vpop.f32.mrf.mxu0
        %v280 = vadd.f32 %v192, %v279
        %281 = vmatmul.bf16.gmra.mxu0 %v242
        %v282 = vpop.f32.mrf.mxu0
        %v283 = vadd.f32 %v192, %v282
        %v284 = vpop.f32.mrf.mxu0
        %v285 = vadd.f32 %v192, %v284
        %286 = vmatmul.bf16.gmra.mxu0 %v245
        %v287 = vpop.f32.mrf.mxu0
        %v288 = vadd.f32 %v192, %v287
        %v289 = vpop.f32.mrf.mxu0
        %v290 = vadd.f32 %v192, %v289
        %291 = vmatmul.bf16.gmra.mxu0 %v248
        %v292 = vpop.f32.mrf.mxu0
        %v293 = vadd.f32 %v192, %v292
        %v294 = vpop.f32.mrf.mxu0
        %v295 = vadd.f32 %v192, %v294
        %296 = vmatmul.bf16.gmra.mxu0 %v251
        %v297 = vpop.f32.mrf.mxu0
        %v298 = vadd.f32 %v192, %v297
        %v299 = vpop.f32.mrf.mxu0
        %v300 = vadd.f32 %v192, %v299
        %301 = vmatmul.bf16.gmra.mxu0 %v254
        %v302 = vpop.f32.mrf.mxu0
        %v303 = vadd.f32 %v192, %v302
        %v304 = vpop.f32.mrf.mxu0
        %v305 = vadd.f32 %v192, %v304
        %306 = vmatmul.bf16.gmra.mxu0 %v257
        %v307 = vpop.f32.mrf.mxu0
        %v308 = vadd.f32 %v192, %v307
        %v309 = vpop.f32.mrf.mxu0
        %v310 = vadd.f32 %v192, %v309
        %311 = vdwg.mxu0
        %v312 = vpack.c.bf16 %v273, %v273
        %v313 = vpack.c.bf16 %v275, %v275
        %v314 = vpack.c.bf16 %v278, %v278
        %v315 = vpack.c.bf16 %v280, %v280
        %v316 = vpack.c.bf16 %v283, %v283
        %v317 = vpack.c.bf16 %v285, %v285
        %v318 = vpack.c.bf16 %v288, %v288
        %v319 = vpack.c.bf16 %v290, %v290
        %v320 = vpack.c.bf16 %v293, %v293
        %v321 = vpack.c.bf16 %v295, %v295
        %v322 = vpack.c.bf16 %v298, %v298
        %v323 = vpack.c.bf16 %v300, %v300
        %v324 = vpack.c.bf16 %v303, %v303
        %v325 = vpack.c.bf16 %v305, %v305
        %v326 = vpack.c.bf16 %v308, %v308
        %v327 = vpack.c.bf16 %v310, %v310
        %328 = vst [vmem:[%s164] sm:$0xf] %v312
        %329 = vst [vmem:[%s164 + $0x4] sm:$0xf] %v313
        %330 = vst [vmem:[%s164 + $0x8] sm:$0xf] %v314
        %331 = vst [vmem:[%s164 + $0xc] sm:$0xf] %v315
        %332 = vst [vmem:[%s164 + $0x10] sm:$0xf] %v316
        %333 = vst [vmem:[%s164 + $0x14] sm:$0xf] %v317
        %334 = vst [vmem:[%s164 + $0x18] sm:$0xf] %v318
        %335 = vst [vmem:[%s164 + $0x1c] sm:$0xf] %v319
        %336 = vst [vmem:[%s164 + $0x20] sm:$0xf] %v320
        %337 = vst [vmem:[%s164 + $0x24] sm:$0xf] %v321
        %338 = vst [vmem:[%s164 + $0x28] sm:$0xf] %v322
        %339 = vst [vmem:[%s164 + $0x2c] sm:$0xf] %v323
        %340 = vst [vmem:[%s164 + $0x30] sm:$0xf] %v324
        %341 = vst [vmem:[%s164 + $0x34] sm:$0xf] %v325
        %342 = vst [vmem:[%s164 + $0x38] sm:$0xf] %v326
        %343 = vst [vmem:[%s164 + $0x3c] sm:$0xf] %v327
        %s344 = sand.u32 %s93, 1
        %s345 = scalar_lea.sflag [#allocation3], %s344
        %s346 = sand.u32 %s93, 1
        %s347 = smul.addr %s346, 64
        %s348 = scalar_lea.vmem [#allocation2], %s347
        // Predicated region
        $region33: #{tpu_custom_call.1} parent=31 // pred_check
          %p349 = pneg %p103
        $region34: #{tpu_custom_call.1} parent=31 // pred_check_branch
          %351 = sbr.rel (%p349) target = $region36
        $region35: #{tpu_custom_call.1} parent=31 // pred_region
          %s352 = smul.u32 16, %s17
          %354 = vsyncadd %s345, 0
          %s355 = smul.addr %s352, 4
          %s356 = scalar_lea.hbm %s3, %s355
          %s357 = sshll.u32 %s348, 4
          %s358 = int_to_ptr.vmem [resolvable:$true] %s357
          %s359 = sshll.u32 %s356, 4
          %s360 = int_to_ptr.hbm [resolvable:$true] %s359
          %365 = dma.vmem_to_hbm [thread:$0]  %s358, 1024, %s360, %s345, 64, 64, 4
        $region36: #{tpu_custom_call.1} parent=31 // pred_fallthru
          _
      $region32: #{tpu_custom_call.1} parent=5 // pred_fallthru
        _
      %p366 = scmp.le.s32.totalorder 2, %s12
      // Predicated region
      $region37: #{tpu_custom_call.1} parent=5 // pred_check
        %p367 = pneg %p366
      $region38: #{tpu_custom_call.1} parent=5 // pred_check_branch
        %369 = sbr.rel (%p367) target = $region40
      $region39: #{tpu_custom_call.1} parent=5 // pred_region
        %s370 = ssub.s32 %s12, 2
        // Predicated region
        $region41: #{tpu_custom_call.1} parent=39 // pred_check
          %p371 = pneg %p109
        $region42: #{tpu_custom_call.1} parent=39 // pred_check_branch
          %373 = sbr.rel (%p371) target = $region44
        $region43: #{tpu_custom_call.1} parent=39 // pred_region
          %s374 = sand.u32 %s94, 1
          %s375 = scalar_lea.sflag [#allocation3], %s374
          %s376 = sand.u32 %s94, 1
          %s377 = smul.addr %s376, 64
          %s378 = scalar_lea.vmem [#allocation2], %s377
          %380 = dma.done %s375, 1024
        $region44: #{tpu_custom_call.1} parent=39 // pred_fallthru
          _
      $region40: #{tpu_custom_call.1} parent=5 // pred_fallthru
        _
    $region6: #{tpu_custom_call.1} parent=1 // loop_footer
      %s16 = sadd.s32 1, %s12
    $region7: #{tpu_custom_call.1} parent=1 // loop_footer_branch
      %11 = sbr.rel target = $region3
    $region8: #{tpu_custom_call.1} parent=1 // loop_exit
      _
    %381 = vsyncpa [#allocation3], 1
    %s382 = scalar_lea.sflag [#allocation3], 1
    %383 = vsyncpa %s382, 1

</llo_original>
